<compile_context>
chip_gen: v7x
topology: tpu7x:2x2x1
jax: 0.10.0
libtpu: 0.0.40
codegen_flags: <defaults>
</compile_context>

<pallas_src>
import functools

import jax
import jax.numpy as jnp
from jax.experimental import pallas as pl
from jax.experimental.pallas import tpu as pltpu


def _round_up(x, m):
    return (x + m - 1) // m * m


def ann_kernel(x_ref, p_ref, o_ref, *, in_size, l1, l2, r1, r2):
    # Parameter slab layout (rows x lanes), all slices static:
    #   rows [0, l1)      : W1 (l1, in)  at cols [0, in),  b1 column at col `in`
    #   rows [r1, r1+l2)  : W2 (l2, l1)  at cols [0, l1),  b2 column at col `l1`
    #   row   r1+r2       : W3 row (1, l2) at cols [0, l2), b3 scalar at col `l2`
    w1 = p_ref[0:l1, 0:in_size]                      # (l1, in)
    b1 = p_ref[0:l1, in_size:in_size + 1]            # (l1, 1)  broadcasts over batch lanes
    w2 = p_ref[r1:r1 + l2, 0:l1]                     # (l2, l1)
    b2 = p_ref[r1:r1 + l2, l1:l1 + 1]                # (l2, 1)
    w3 = p_ref[r1 + r2:r1 + r2 + 1, 0:l2]            # (1, l2)
    b3 = p_ref[r1 + r2:r1 + r2 + 1, l2:l2 + 1]       # (1, 1)

    xT = x_ref[...]                                  # (in, batch) -- batch on lanes

    # fc1 + relu, fc2 + relu (MXU matmuls, f32 accumulation)
    h1 = jnp.maximum(jnp.dot(w1, xT, preferred_element_type=jnp.float32) + b1, 0.0)
    h2 = jnp.maximum(jnp.dot(w2, h1, preferred_element_type=jnp.float32) + b2, 0.0)
    # fc3 + sigmoid: (1, l2) @ (l2, batch) -> lane-dense (1, batch) logits row
    logits = jnp.dot(w3, h2, preferred_element_type=jnp.float32) + b3
    o_ref[...] = jax.nn.sigmoid(logits).astype(o_ref.dtype)


def ann_forward(x, w1, b1, w2, b2, w3, b3):
    """sigmoid(relu(relu(x@W1.T+b1)@W2.T+b2)@W3.T+b3) with PyTorch nn.Linear layout.

    x: (batch, in); w1: (l1, in); b1: (l1,); w2: (l2, l1); b2: (l2,);
    w3: (1, l2); b3: (1,).  Returns (batch, 1) float32.
    """
    batch, in_size = x.shape
    l1 = w1.shape[0]
    l2 = w2.shape[0]

    r1 = _round_up(l1, 8)
    r2 = _round_up(l2, 8)
    rows = r1 + r2 + 8
    lanes = _round_up(max(in_size, l1, l2) + 1, 128)

    # One packed parameter slab -> a single VMEM DMA for all weights/biases.
    f32 = jnp.float32
    slab = jnp.zeros((rows, lanes), f32)
    slab = slab.at[0:l1, 0:in_size].set(w1.astype(f32))
    slab = slab.at[0:l1, in_size].set(b1.astype(f32))
    slab = slab.at[r1:r1 + l2, 0:l1].set(w2.astype(f32))
    slab = slab.at[r1:r1 + l2, l1].set(b2.astype(f32))
    slab = slab.at[r1 + r2, 0:l2].set(w3.reshape(l2).astype(f32))
    slab = slab.at[r1 + r2, l2].set(b3.reshape(()).astype(f32))

    xT = x.astype(f32).T                             # (in, batch): batch on lanes

    kernel = functools.partial(
        ann_kernel, in_size=in_size, l1=l1, l2=l2, r1=r1, r2=r2)
    vmem = pltpu.MemorySpace.VMEM
    outT = pl.pallas_call(
        kernel,
        out_shape=jax.ShapeDtypeStruct((1, batch), f32),
        in_specs=[pl.BlockSpec(memory_space=vmem),   # xT
                  pl.BlockSpec(memory_space=vmem)],  # packed parameter slab
        out_specs=pl.BlockSpec(memory_space=vmem),
    )(xT, slab)
    return outT.reshape(batch, 1)


def reference_forward(x, w1, b1, w2, b2, w3, b3):
    h1 = jnp.maximum(x @ w1.T + b1, 0.0)
    h2 = jnp.maximum(h1 @ w2.T + b2, 0.0)
    return jax.nn.sigmoid(h2 @ w3.T + b3)


if __name__ == "__main__":
    # Small shapes consistent with ANN(input_size, l1_size, l2_size)
    batch, input_size, l1_size, l2_size = 64, 16, 32, 32

    key = jax.random.PRNGKey(0)
    kx, k1, kb1, k2, kb2, k3, kb3 = jax.random.split(key, 7)

    x = jax.random.normal(kx, (batch, input_size), dtype=jnp.float32)
    # Parameters in PyTorch nn.Linear layout: weight (out, in), bias (out,)
    w1 = jax.random.normal(k1, (l1_size, input_size), dtype=jnp.float32) * 0.1
    b1 = jax.random.normal(kb1, (l1_size,), dtype=jnp.float32) * 0.1
    w2 = jax.random.normal(k2, (l2_size, l1_size), dtype=jnp.float32) * 0.1
    b2 = jax.random.normal(kb2, (l2_size,), dtype=jnp.float32) * 0.1
    w3 = jax.random.normal(k3, (1, l2_size), dtype=jnp.float32) * 0.1
    b3 = jax.random.normal(kb3, (1,), dtype=jnp.float32) * 0.1

    fwd = jax.jit(ann_forward)
    out = jax.block_until_ready(fwd(x, w1, b1, w2, b2, w3, b3))
    ref = reference_forward(x, w1, b1, w2, b2, w3, b3)

    assert out.shape == (batch, 1)
    assert jnp.allclose(out, ref, atol=1e-5, rtol=1e-5), "mismatch vs reference"

    print("KERNEL_OK")
</pallas_src>

<mosaic_0001>
module attributes {stable_mosaic.version = 11 : i64} {
  func.func @ann_kernel(%arg0: memref<16x64xf32, #tpu.memory_space<vmem>>, %arg1: memref<72x128xf32, #tpu.memory_space<vmem>>, %arg2: memref<1x64xf32, #tpu.memory_space<vmem>>) attributes {dimension_semantics = [], scalar_prefetch = 0 : i64, scratch_operands = 0 : i64, tpu.core_type = #tpu.core_type<tc>} {
    %c0 = arith.constant 0 : index
    %c0_0 = arith.constant 0 : index
    %0 = vector.load %arg1[%c0, %c0_0] : memref<72x128xf32, #tpu.memory_space<vmem>>, vector<32x16xf32>
    %c0_1 = arith.constant 0 : index
    %c16 = arith.constant 16 : index
    %1 = vector.load %arg1[%c0_1, %c16] : memref<72x128xf32, #tpu.memory_space<vmem>>, vector<32x1xf32>
    %c32 = arith.constant 32 : index
    %c0_2 = arith.constant 0 : index
    %2 = vector.load %arg1[%c32, %c0_2] : memref<72x128xf32, #tpu.memory_space<vmem>>, vector<32x32xf32>
    %c32_3 = arith.constant 32 : index
    %c32_4 = arith.constant 32 : index
    %3 = vector.load %arg1[%c32_3, %c32_4] : memref<72x128xf32, #tpu.memory_space<vmem>>, vector<32x1xf32>
    %c64 = arith.constant 64 : index
    %c0_5 = arith.constant 0 : index
    %4 = vector.load %arg1[%c64, %c0_5] : memref<72x128xf32, #tpu.memory_space<vmem>>, vector<1x32xf32>
    %c64_6 = arith.constant 64 : index
    %c32_7 = arith.constant 32 : index
    %5 = vector.load %arg1[%c64_6, %c32_7] : memref<72x128xf32, #tpu.memory_space<vmem>>, vector<1x1xf32>
    %c0_8 = arith.constant 0 : index
    %c0_9 = arith.constant 0 : index
    %6 = vector.load %arg0[%c0_8, %c0_9] : memref<16x64xf32, #tpu.memory_space<vmem>>, vector<16x64xf32>
    %cst = arith.constant dense<0.000000e+00> : vector<32x64xf32>
    %7 = tpu.matmul %0, %6, %cst {dimension_numbers = #tpu.dot_dimension_numbers<[1], [0], [0], [1], [0, 0, 1, 1], [], []>} : vector<32x16xf32>, vector<16x64xf32>, vector<32x64xf32> -> vector<32x64xf32>
    %8 = vector.broadcast %1 : vector<32x1xf32> to vector<32x64xf32>
    %9 = arith.addf %7, %8 : vector<32x64xf32>
    %cst_10 = arith.constant 0.000000e+00 : f32
    %10 = vector.broadcast %cst_10 : f32 to vector<32x64xf32>
    %11 = arith.maximumf %9, %10 : vector<32x64xf32>
    %cst_11 = arith.constant dense<0.000000e+00> : vector<32x64xf32>
    %12 = tpu.matmul %2, %11, %cst_11 {dimension_numbers = #tpu.dot_dimension_numbers<[1], [0], [0], [1], [0, 0, 1, 1], [], []>} : vector<32x32xf32>, vector<32x64xf32>, vector<32x64xf32> -> vector<32x64xf32>
    %13 = vector.broadcast %3 : vector<32x1xf32> to vector<32x64xf32>
    %14 = arith.addf %12, %13 : vector<32x64xf32>
    %cst_12 = arith.constant 0.000000e+00 : f32
    %15 = vector.broadcast %cst_12 : f32 to vector<32x64xf32>
    %16 = arith.maximumf %14, %15 : vector<32x64xf32>
    %cst_13 = arith.constant dense<0.000000e+00> : vector<1x64xf32>
    %17 = tpu.matmul %4, %16, %cst_13 {dimension_numbers = #tpu.dot_dimension_numbers<[1], [0], [0], [1], [0, 0, 1, 1], [], []>} : vector<1x32xf32>, vector<32x64xf32>, vector<1x64xf32> -> vector<1x64xf32>
    %18 = vector.broadcast %5 : vector<1x1xf32> to vector<1x64xf32>
    %19 = arith.addf %17, %18 : vector<1x64xf32>
    %20 = arith.negf %19 : vector<1x64xf32>
    %21 = math.exp %20 : vector<1x64xf32>
    %cst_14 = arith.constant 1.000000e+00 : f32
    %22 = vector.broadcast %cst_14 : f32 to vector<1x64xf32>
    %23 = arith.addf %22, %21 : vector<1x64xf32>
    %24 = arith.divf %22, %23 : vector<1x64xf32>
    %c0_15 = arith.constant 0 : index
    %c0_16 = arith.constant 0 : index
    %25 = vector.load %arg2[%c0_15, %c0_16] : memref<1x64xf32, #tpu.memory_space<vmem>>, vector<1x64xf32>
    tpu.vector_store %arg2[%c0_15, %c0_16], %24 {strides = array<i32>} : memref<1x64xf32, #tpu.memory_space<vmem>>, vector<1x64xf32>,
    return
  }
}

</mosaic_0001>

<llo_original>
// kernel: ann_forward.1
$region0: #{ann_forward.1}
  #allocation0 [shape = 'u32[]', space=smem, size = 0x4, offset = 0x4, fixed_abs, tag = 'smem constant byte address 0x4 - core index']
  #allocation1 [shape = 'u32[144,128]{1,0:T(1,128)}', space=vmem, size = 0x12000, scoped, tag = 'internal scratch']
  %s0 = inlined_call_operand.vmem [shape: f32[16,64], index: 0, kind: input, shape index: {}]
  %s1 = inlined_call_operand.vmem [shape: f32[72,128], index: 1, kind: input, shape index: {}]
  %s2 = inlined_call_operand.hbm [shape: f32[1,64], index: 2, kind: output, shape index: {}]
  %s3 = sld [smem:[#allocation0]]
  $region18: #{ann_forward.1} parent=0
    _
  %s5 = ssub.s32 1, %s3
  %s6 = scalar_select 0, %s5, %s3
  $region1: #{ann_forward.1} parent=0
    #allocation2 [shape = 'u8[512]{0}', space=vmem, size = 0x400, scoped, tag = 'output window, operand 0, single buffered']
    #allocation3 [shape = 's32[1]{0}', space=sflag, size = 0x4, scoped, tag = 'scoped memory for ann_forward.1']
    %7 = vsyncpa [#allocation3], 0
    // Predicated region
    $region2: #{ann_forward.1} parent=1 // pred_check
      _
    $region3: #{ann_forward.1} parent=1 // pred_check_branch
      %9 = sbr.rel (0) target = $region5
    $region4: #{ann_forward.1} parent=1 // pred_region
      _
    $region5: #{ann_forward.1} parent=1 // pred_fallthru
      _
    // Predicated region
    $region6: #{ann_forward.1} parent=1 // pred_check
      _
    $region7: #{ann_forward.1} parent=1 // pred_check_branch
      %11 = sbr.rel (0) target = $region9
    $region8: #{ann_forward.1} parent=1 // pred_region
      _
    $region9: #{ann_forward.1} parent=1 // pred_fallthru
      _
    %v12 = vld [vmem:[%s1] sm:$0xff]
    %v13 = vld [vmem:[%s1 + $0x8] sm:$0xff]
    %v14 = vld [vmem:[%s1 + $0x10] sm:$0xff]
    %v15 = vld [vmem:[%s1 + $0x18] sm:$0xff]
    %v16 = vld [vmem:[%s1 + $0x20] sm:$0xff]
    %v17 = vld [vmem:[%s1 + $0x28] sm:$0xff]
    %v18 = vld [vmem:[%s1 + $0x30] sm:$0xff]
    %v19 = vld [vmem:[%s1 + $0x38] sm:$0xff]
    %v20 = vld [vmem:[%s1 + $0x40] sm:$0x1]
    %v21 = vld [vmem:[%s0] sm:$0xff]
    %v22 = vld [vmem:[%s0 + $0x8] sm:$0xff]
    %24 = vset.pattern.permute.xlu0 16
    %25 = vperm.xlu0 %24, %v12
    %v26 = vpop.permute.xlu0 %25
    %29 = vset.pattern.permute.xlu0 16
    %30 = vperm.xlu0 %29, %v13
    %v31 = vpop.permute.xlu0 %30
    %34 = vset.pattern.permute.xlu0 16
    %35 = vperm.xlu0 %34, %v14
    %v36 = vpop.permute.xlu0 %35
    %39 = vset.pattern.permute.xlu0 16
    %40 = vperm.xlu0 %39, %v15
    %v41 = vpop.permute.xlu0 %40
    %vm43 = vcmask 130048
    %v44 = vsel %vm43, %v12, 0
    %v46 = vsel %vm43, %v13, 0
    %v48 = vsel %vm43, %v14, 0
    %v50 = vsel %vm43, %v15, 0
    %52 = vmatprep.subr.mxu0 0.0
    %53 = vmatpush1.msra.mxu0 %v21
    %54 = vmatprep.subr.mxu0 0.0
    %55 = vmatpush1.msra.mxu0 %v22
    %56 = vmatprep.subr.mxu0 0.0
    %57 = vmatpush1.msra.mxu0 0.0
    %58 = vmatprep.subr.mxu0 0.0
    %59 = vmatpush1.msra.mxu0 0.0
    %60 = vmatprep.subr.mxu0 0.0
    %61 = vmatpush1.msra.mxu0 0.0
    %62 = vmatprep.subr.mxu0 0.0
    %63 = vmatpush1.msra.mxu0 0.0
    %64 = vmatprep.subr.mxu0 0.0
    %65 = vmatpush1.msra.mxu0 0.0
    %66 = vmatprep.subr.mxu0 0.0
    %67 = vmatpush1.msra.mxu0 0.0
    %68 = vmatprep.subr.mxu0 0.0
    %69 = vmatpush1.msra.mxu0 0.0
    %70 = vmatprep.subr.mxu0 0.0
    %71 = vmatpush1.msra.mxu0 0.0
    %72 = vmatprep.subr.mxu0 0.0
    %73 = vmatpush1.msra.mxu0 0.0
    %74 = vmatprep.subr.mxu0 0.0
    %75 = vmatpush1.msra.mxu0 0.0
    %76 = vmatprep.subr.mxu0 0.0
    %77 = vmatpush1.msra.mxu0 0.0
    %78 = vmatprep.subr.mxu0 0.0
    %79 = vmatpush1.msra.mxu0 0.0
    %80 = vmatprep.subr.mxu0 0.0
    %81 = vmatpush1.msra.mxu0 0.0
    %82 = vmatprep.subr.mxu0 0.0
    %83 = vmatpush1.msra.mxu0 0.0
    %84 = vmatprep.subr.mxu0 0.0
    %85 = vmatpush1.msra.mxu0 0.0
    %86 = vmatprep.subr.mxu0 0.0
    %87 = vmatpush1.msra.mxu0 0.0
    %88 = vmatprep.subr.mxu0 0.0
    %89 = vmatpush1.msra.mxu0 0.0
    %90 = vmatprep.subr.mxu0 0.0
    %91 = vmatpush1.msra.mxu0 0.0
    %92 = vmatprep.subr.mxu0 0.0
    %93 = vmatpush1.msra.mxu0 0.0
    %94 = vmatprep.subr.mxu0 0.0
    %95 = vmatpush1.msra.mxu0 0.0
    %96 = vmatprep.subr.mxu0 0.0
    %97 = vmatpush1.msra.mxu0 0.0
    %98 = vmatprep.subr.mxu0 0.0
    %99 = vmatpush1.msra.mxu0 0.0
    %100 = vmatprep.subr.mxu0 0.0
    %101 = vmatpush1.msra.mxu0 0.0
    %102 = vmatprep.subr.mxu0 0.0
    %103 = vmatpush1.msra.mxu0 0.0
    %104 = vmatprep.subr.mxu0 0.0
    %105 = vmatpush1.msra.mxu0 0.0
    %106 = vmatprep.subr.mxu0 0.0
    %107 = vmatpush1.msra.mxu0 0.0
    %108 = vmatprep.subr.mxu0 0.0
    %109 = vmatpush1.msra.mxu0 0.0
    %110 = vmatprep.subr.mxu0 0.0
    %111 = vmatpush1.msra.mxu0 0.0
    %112 = vmatprep.subr.mxu0 0.0
    %113 = vmatpush1.msra.mxu0 0.0
    %114 = vmatprep.subr.mxu0 0.0
    %115 = vmatpush1.msra.mxu0 0.0
    %116 = vmatprep.mubr.f32.mxu0 0.0
    %117 = vmatmul.mubr.f32.gmra.mrb[0].mxu0 %v44
    %v118 = vpop.f32.mrb[0].mxu0
    %v119 = vadd.f32 %v26, %v118
    %v120 = vpop.f32.mrb[0].mxu0
    %121 = vmatprep.mubr.f32.mxu0 0.0
    %122 = vmatmul.mubr.f32.gmra.mrb[0].mxu0 %v46
    %v123 = vpop.f32.mrb[0].mxu0
    %v124 = vadd.f32 %v31, %v123
    %v125 = vpop.f32.mrb[0].mxu0
    %126 = vmatprep.mubr.f32.mxu0 0.0
    %127 = vmatmul.mubr.f32.gmra.mrb[0].mxu0 %v48
    %v128 = vpop.f32.mrb[0].mxu0
    %v129 = vadd.f32 %v36, %v128
    %v130 = vpop.f32.mrb[0].mxu0
    %131 = vmatprep.mubr.f32.mxu0 0.0
    %132 = vmatmul.mubr.f32.gmra.mrb[0].mxu0 %v50
    %v133 = vpop.f32.mrb[0].mxu0
    %v134 = vadd.f32 %v41, %v133
    %v135 = vpop.f32.mrb[0].mxu0
    %136 = vdwg.mxu0
    %v137 = vmax.f32 %v119, 0.0
    %v138 = vmax.f32 %v124, 0.0
    %v139 = vmax.f32 %v129, 0.0
    %v140 = vmax.f32 %v134, 0.0
    %142 = vset.pattern.permute.xlu0 32
    %143 = vperm.xlu0 %142, %v16
    %v144 = vpop.permute.xlu0 %143
    %147 = vset.pattern.permute.xlu0 32
    %148 = vperm.xlu0 %147, %v17
    %v149 = vpop.permute.xlu0 %148
    %152 = vset.pattern.permute.xlu0 32
    %153 = vperm.xlu0 %152, %v18
    %v154 = vpop.permute.xlu0 %153
    %157 = vset.pattern.permute.xlu0 32
    %158 = vperm.xlu0 %157, %v19
    %v159 = vpop.permute.xlu0 %158
    %vm161 = vcmask 261120
    %v162 = vsel %vm161, %v16, 0
    %v164 = vsel %vm161, %v17, 0
    %v166 = vsel %vm161, %v18, 0
    %v168 = vsel %vm161, %v19, 0
    %170 = vmatprep.subr.mxu0 0.0
    %171 = vmatpush1.msra.mxu0 %v137
    %172 = vmatprep.subr.mxu0 0.0
    %173 = vmatpush1.msra.mxu0 %v138
    %174 = vmatprep.subr.mxu0 0.0
    %175 = vmatpush1.msra.mxu0 %v139
    %176 = vmatprep.subr.mxu0 0.0
    %177 = vmatpush1.msra.mxu0 %v140
    %178 = vmatprep.subr.mxu0 0.0
    %179 = vmatpush1.msra.mxu0 0.0
    %180 = vmatprep.subr.mxu0 0.0
    %181 = vmatpush1.msra.mxu0 0.0
    %182 = vmatprep.subr.mxu0 0.0
    %183 = vmatpush1.msra.mxu0 0.0
    %184 = vmatprep.subr.mxu0 0.0
    %185 = vmatpush1.msra.mxu0 0.0
    %186 = vmatprep.subr.mxu0 0.0
    %187 = vmatpush1.msra.mxu0 0.0
    %188 = vmatprep.subr.mxu0 0.0
    %189 = vmatpush1.msra.mxu0 0.0
    %190 = vmatprep.subr.mxu0 0.0
    %191 = vmatpush1.msra.mxu0 0.0
    %192 = vmatprep.subr.mxu0 0.0
    %193 = vmatpush1.msra.mxu0 0.0
    %194 = vmatprep.subr.mxu0 0.0
    %195 = vmatpush1.msra.mxu0 0.0
    %196 = vmatprep.subr.mxu0 0.0
    %197 = vmatpush1.msra.mxu0 0.0
    %198 = vmatprep.subr.mxu0 0.0
    %199 = vmatpush1.msra.mxu0 0.0
    %200 = vmatprep.subr.mxu0 0.0
    %201 = vmatpush1.msra.mxu0 0.0
    %202 = vmatprep.subr.mxu0 0.0
    %203 = vmatpush1.msra.mxu0 0.0
    %204 = vmatprep.subr.mxu0 0.0
    %205 = vmatpush1.msra.mxu0 0.0
    %206 = vmatprep.subr.mxu0 0.0
    %207 = vmatpush1.msra.mxu0 0.0
    %208 = vmatprep.subr.mxu0 0.0
    %209 = vmatpush1.msra.mxu0 0.0
    %210 = vmatprep.subr.mxu0 0.0
    %211 = vmatpush1.msra.mxu0 0.0
    %212 = vmatprep.subr.mxu0 0.0
    %213 = vmatpush1.msra.mxu0 0.0
    %214 = vmatprep.subr.mxu0 0.0
    %215 = vmatpush1.msra.mxu0 0.0
    %216 = vmatprep.subr.mxu0 0.0
    %217 = vmatpush1.msra.mxu0 0.0
    %218 = vmatprep.subr.mxu0 0.0
    %219 = vmatpush1.msra.mxu0 0.0
    %220 = vmatprep.subr.mxu0 0.0
    %221 = vmatpush1.msra.mxu0 0.0
    %222 = vmatprep.subr.mxu0 0.0
    %223 = vmatpush1.msra.mxu0 0.0
    %224 = vmatprep.subr.mxu0 0.0
    %225 = vmatpush1.msra.mxu0 0.0
    %226 = vmatprep.subr.mxu0 0.0
    %227 = vmatpush1.msra.mxu0 0.0
    %228 = vmatprep.subr.mxu0 0.0
    %229 = vmatpush1.msra.mxu0 0.0
    %230 = vmatprep.subr.mxu0 0.0
    %231 = vmatpush1.msra.mxu0 0.0
    %232 = vmatprep.subr.mxu0 0.0
    %233 = vmatpush1.msra.mxu0 0.0
    %234 = vmatprep.mubr.f32.mxu0 0.0
    %235 = vmatmul.mubr.f32.gmra.mrb[0].mxu0 %v162
    %v236 = vpop.f32.mrb[0].mxu0
    %v237 = vadd.f32 %v144, %v236
    %v238 = vpop.f32.mrb[0].mxu0
    %239 = vmatprep.mubr.f32.mxu0 0.0
    %240 = vmatmul.mubr.f32.gmra.mrb[0].mxu0 %v164
    %v241 = vpop.f32.mrb[0].mxu0
    %v242 = vadd.f32 %v149, %v241
    %v243 = vpop.f32.mrb[0].mxu0
    %244 = vmatprep.mubr.f32.mxu0 0.0
    %245 = vmatmul.mubr.f32.gmra.mrb[0].mxu0 %v166
    %v246 = vpop.f32.mrb[0].mxu0
    %v247 = vadd.f32 %v154, %v246
    %v248 = vpop.f32.mrb[0].mxu0
    %249 = vmatprep.mubr.f32.mxu0 0.0
    %250 = vmatmul.mubr.f32.gmra.mrb[0].mxu0 %v168
    %v251 = vpop.f32.mrb[0].mxu0
    %v252 = vadd.f32 %v159, %v251
    %v253 = vpop.f32.mrb[0].mxu0
    %254 = vdwg.mxu0
    %v255 = vmax.f32 %v237, 0.0
    %v256 = vmax.f32 %v242, 0.0
    %v257 = vmax.f32 %v247, 0.0
    %v258 = vmax.f32 %v252, 0.0
    %260 = vset.pattern.permute.xlu0 32
    %261 = vperm.xlu0 %260, %v20
    %v262 = vpop.permute.xlu0 %261
    %v264 = vsel %vm161, %v20, 0
    %266 = vmatprep.subr.mxu0 0.0
    %267 = vmatpush1.msra.mxu0 %v255
    %268 = vmatprep.subr.mxu0 0.0
    %269 = vmatpush1.msra.mxu0 %v256
    %270 = vmatprep.subr.mxu0 0.0
    %271 = vmatpush1.msra.mxu0 %v257
    %272 = vmatprep.subr.mxu0 0.0
    %273 = vmatpush1.msra.mxu0 %v258
    %274 = vmatprep.subr.mxu0 0.0
    %275 = vmatpush1.msra.mxu0 0.0
    %276 = vmatprep.subr.mxu0 0.0
    %277 = vmatpush1.msra.mxu0 0.0
    %278 = vmatprep.subr.mxu0 0.0
    %279 = vmatpush1.msra.mxu0 0.0
    %280 = vmatprep.subr.mxu0 0.0
    %281 = vmatpush1.msra.mxu0 0.0
    %282 = vmatprep.subr.mxu0 0.0
    %283 = vmatpush1.msra.mxu0 0.0
    %284 = vmatprep.subr.mxu0 0.0
    %285 = vmatpush1.msra.mxu0 0.0
    %286 = vmatprep.subr.mxu0 0.0
    %287 = vmatpush1.msra.mxu0 0.0
    %288 = vmatprep.subr.mxu0 0.0
    %289 = vmatpush1.msra.mxu0 0.0
    %290 = vmatprep.subr.mxu0 0.0
    %291 = vmatpush1.msra.mxu0 0.0
    %292 = vmatprep.subr.mxu0 0.0
    %293 = vmatpush1.msra.mxu0 0.0
    %294 = vmatprep.subr.mxu0 0.0
    %295 = vmatpush1.msra.mxu0 0.0
    %296 = vmatprep.subr.mxu0 0.0
    %297 = vmatpush1.msra.mxu0 0.0
    %298 = vmatprep.subr.mxu0 0.0
    %299 = vmatpush1.msra.mxu0 0.0
    %300 = vmatprep.subr.mxu0 0.0
    %301 = vmatpush1.msra.mxu0 0.0
    %302 = vmatprep.subr.mxu0 0.0
    %303 = vmatpush1.msra.mxu0 0.0
    %304 = vmatprep.subr.mxu0 0.0
    %305 = vmatpush1.msra.mxu0 0.0
    %306 = vmatprep.subr.mxu0 0.0
    %307 = vmatpush1.msra.mxu0 0.0
    %308 = vmatprep.subr.mxu0 0.0
    %309 = vmatpush1.msra.mxu0 0.0
    %310 = vmatprep.subr.mxu0 0.0
    %311 = vmatpush1.msra.mxu0 0.0
    %312 = vmatprep.subr.mxu0 0.0
    %313 = vmatpush1.msra.mxu0 0.0
    %314 = vmatprep.subr.mxu0 0.0
    %315 = vmatpush1.msra.mxu0 0.0
    %316 = vmatprep.subr.mxu0 0.0
    %317 = vmatpush1.msra.mxu0 0.0
    %318 = vmatprep.subr.mxu0 0.0
    %319 = vmatpush1.msra.mxu0 0.0
    %320 = vmatprep.subr.mxu0 0.0
    %321 = vmatpush1.msra.mxu0 0.0
    %322 = vmatprep.subr.mxu0 0.0
    %323 = vmatpush1.msra.mxu0 0.0
    %324 = vmatprep.subr.mxu0 0.0
    %325 = vmatpush1.msra.mxu0 0.0
    %326 = vmatprep.subr.mxu0 0.0
    %327 = vmatpush1.msra.mxu0 0.0
    %328 = vmatprep.subr.mxu0 0.0
    %329 = vmatpush1.msra.mxu0 0.0
    %330 = vmatprep.mubr.f32.mxu0 0.0
    %331 = vmatmul.mubr.f32.gmra.mrb[0].mxu0 %v264
    %v332 = vpop.f32.mrb[0].mxu0
    %v333 = vadd.f32 %v262, %v332
    %v334 = vpop.f32.mrb[0].mxu0
    %335 = vdwg.mxu0
    %v336 = vxor.u32 %v333, 2147483648
    %v337 = vmul.f32 %v336, 1.442695
    %v338 = vpow.pop %v337
    %v339 = vadd.f32 %v338, 1.0
    %v340 = vrcp.pop %v339
    %v341 = vmul.f32 1.0, %v340
    %vm342 = vcmask 516096
    %343 = vst.msk [vmem:[#allocation2] sm:$0x1] %vm342, %v341
    // Predicated region
    $region10: #{ann_forward.1} parent=1 // pred_check
      _
    $region11: #{ann_forward.1} parent=1 // pred_check_branch
      %345 = sbr.rel (0) target = $region13
    $region12: #{ann_forward.1} parent=1 // pred_region
      %s347 = ssub.s32 16, 16
      %348 = vsyncadd [#allocation3], %s347
      %s350 = sshll.u32 [#allocation2], 4
      %s351 = int_to_ptr.vmem [resolvable:$true] %s350
      %353 = dma.vmem_to_hbm [thread:$0]  %s351, 16, %s2, [#allocation3]
    $region13: #{ann_forward.1} parent=1 // pred_fallthru
      _
    // Predicated region
    $region14: #{ann_forward.1} parent=1 // pred_check
      _
    $region15: #{ann_forward.1} parent=1 // pred_check_branch
      %355 = sbr.rel (0) target = $region17
    $region16: #{ann_forward.1} parent=1 // pred_region
      %356 = dma.done [#allocation3], 16
    $region17: #{ann_forward.1} parent=1 // pred_fallthru
      _
    %357 = vsyncpa [#allocation3], 1

</llo_original>
